<compile_context>
chip_gen: v6e
topology: v6e:2x2x1
jax: 0.10.0
libtpu: 0.0.40
codegen_flags: <defaults>
</compile_context>

<pallas_src>
import numpy as np
import jax
import jax.numpy as jnp
from jax.experimental import pallas as pl
from jax.experimental.pallas import tpu as pltpu


def _round_up(x, m):
    return (x + m - 1) // m * m


def _choose_tb(batch):
    """Adaptive batch tile.

    - batch <= 128: exact-ish tile (multiple of 8) -> no 128-row padding waste.
    - batch  > 128: multiple-of-128 tile, capped at 512 (keeps h1/h2 f32
      intermediates + double-buffered tiles far below v5e's 16 MiB scoped-VMEM
      default), preferring >=2 grid steps so v7x's two TensorCores both work.
    """
    if batch <= 128:
        return _round_up(max(batch, 1), 8)
    best_key, best_tb = None, 128
    for cand in (512, 384, 256, 128):
        padded = _round_up(batch, cand)
        key = (padded - batch,                    # least padded rows
               0 if padded // cand >= 2 else 1,   # prefer >=2 grid steps (v7x)
               -cand)                             # then the biggest tile
        if best_key is None or key < best_key:
            best_key, best_tb = key, cand
    return best_tb


# ----------------------------------------------------------------------------
# Kernel: one batch tile of the fused 3-layer critic.
# ----------------------------------------------------------------------------
def critic_kernel(x_ref, w1_ref, b1_ref, w2_ref, b2_ref, w3_ref, b3_ref,
                  a_ref, p_ref, out_ref):
    mm_dtype = w1_ref.dtype

    # Layer 1 (+ action pass-through baked into W1_ext):
    #   h1[:, :H1]        = relu(state @ W1 + b1)
    #   h1[:, H1:H1+A]    = relu(+action)
    #   h1[:, H1+A:H1+2A] = relu(-action)     (padded bias/cols are exactly 0)
    h1 = jnp.dot(x_ref[...], w1_ref[...], preferred_element_type=jnp.float32)
    h1 = jnp.maximum(h1 + b1_ref[...], 0.0)

    # Layer 2: single dense matmul over the padded concat.
    # relu(a) @ W2a + relu(-a) @ (-W2a) == a @ W2a exactly.
    h2 = jnp.dot(h1.astype(mm_dtype), w2_ref[...],
                 preferred_element_type=jnp.float32)
    h2 = jnp.maximum(h2 + b2_ref[...], 0.0)

    # Layer 3: N=1 output -> VPU multiply + lane reduction (no MXU).
    q = jnp.sum(h2 * w3_ref[...], axis=-1, keepdims=True)        # [tb, 1] f32

    # Batch-along-lanes relayout: out[j, l] = q[j*L + l].
    #   p_ref[r, l] = (r % L == l),  a_ref[j, r] = (r // L == j)  (exact 0/1).
    # Output block is [tb//L, L]: lane-dense, 4 B per batch row written.
    out = jnp.dot(a_ref[...], q * p_ref[...],
                  preferred_element_type=jnp.float32)             # [R, L]
    out_ref[...] = out + b3_ref[0]


# ----------------------------------------------------------------------------
# Wrapper
# ----------------------------------------------------------------------------
def critic_forward(state, action, packed, *, tb=None):
    """state: [B, state_size], action: [B, action_size] -> q: [B, 1] (f32)."""
    if state.ndim == 1:                       # PyTorch forward() parity
        state = state[None, :]
    B = state.shape[0]
    S = packed["state_size"]
    A = packed["action_size"]
    in_pad, h1_pad = packed["w1"].shape
    h2_pad = packed["w2"].shape[1]

    if tb is None:
        tb = _choose_tb(B)
    assert tb % 8 == 0 and (tb <= 128 or tb % 128 == 0)
    lanes = min(tb, 128)
    rows = tb // lanes
    b_pad = _round_up(max(B, 1), tb)
    grid = (b_pad // tb,)

    # Padded input slab in ONE fused op, already in the matmul dtype:
    # cols [0,S) = state, [S,S+A) = action, remaining cols / rows zero.
    dt = packed["w1"].dtype
    x_in = jnp.pad(jnp.concatenate([state, action], axis=1).astype(dt),
                   ((0, b_pad - B), (0, in_pad - (S + A))))

    # Exact 0/1 selection matrices for the batch-along-lanes output relayout
    # (tiny, grid-resident: p_sel is [tb, lanes], a_sel is [rows, tb]).
    p_sel = jnp.asarray(np.tile(np.eye(lanes, dtype=np.float32), (rows, 1)))
    a_sel = jnp.asarray(np.kron(np.eye(rows, dtype=np.float32),
                                np.ones((1, lanes), np.float32)))

    def resident(arr):   # same block every grid step -> stays in VMEM
        return pl.BlockSpec(arr.shape, lambda i, _nd=arr.ndim: (0,) * _nd)

    flops = 2 * b_pad * (in_pad * h1_pad + h1_pad * h2_pad + h2_pad)
    bytes_accessed = (int(x_in.size) * x_in.dtype.itemsize + b_pad * 4 +
                      sum(int(packed[k].size) * packed[k].dtype.itemsize
                          for k in ("w1", "b1", "w2", "b2", "w3", "b3")))

    out = pl.pallas_call(
        critic_kernel,
        out_shape=jax.ShapeDtypeStruct((grid[0], rows, lanes), jnp.float32),
        grid=grid,
        in_specs=[
            pl.BlockSpec((tb, in_pad), lambda i: (i, 0)),        # batch tile
            resident(packed["w1"]),
            resident(packed["b1"]),
            resident(packed["w2"]),
            resident(packed["b2"]),
            resident(packed["w3"]),
            pl.BlockSpec(memory_space=pltpu.MemorySpace.SMEM),   # b3 scalar
            resident(a_sel),
            resident(p_sel),
        ],
        out_specs=pl.BlockSpec((None, rows, lanes), lambda i: (i, 0, 0)),
        compiler_params=pltpu.CompilerParams(
            dimension_semantics=("parallel",)),
        cost_estimate=pl.CostEstimate(flops=int(flops), transcendentals=0,
                                      bytes_accessed=int(bytes_accessed)),
    )(x_in, packed["w1"], packed["b1"], packed["w2"], packed["b2"],
      packed["w3"], packed["b3"], a_sel, p_sel)

    # (grid, rows, lanes) row-major == batch order; slice off batch padding.
    return out.reshape(b_pad, 1)[:B]


# ----------------------------------------------------------------------------
# Parameters: raw (PyTorch-equivalent) init + padded packing for the kernel.
# ----------------------------------------------------------------------------
def init_params(key, state_size, action_size, fcs1_units=400, fc2_units=300):
    """Mirrors the PyTorch reset_parameters(): hidden_init uses fan =
    weight.size()[0] (= out_features), fc3 ~ U(-3e-3, 3e-3); biases keep the
    nn.Linear default U(-1/sqrt(in_features), 1/sqrt(in_features))."""
    ks = jax.random.split(key, 6)
    lim1 = 1.0 / jnp.sqrt(fcs1_units)
    lim2 = 1.0 / jnp.sqrt(fc2_units)
    blim1 = 1.0 / jnp.sqrt(state_size)
    blim2 = 1.0 / jnp.sqrt(fcs1_units + action_size)
    blim3 = 1.0 / jnp.sqrt(fc2_units)

    # weights stored as [in, out] (pre-transposed relative to nn.Linear)
    w1 = jax.random.uniform(ks[0], (state_size, fcs1_units), jnp.float32, -lim1, lim1)
    b1 = jax.random.uniform(ks[1], (fcs1_units,), jnp.float32, -blim1, blim1)
    w2 = jax.random.uniform(ks[2], (fcs1_units + action_size, fc2_units),
                            jnp.float32, -lim2, lim2)
    b2 = jax.random.uniform(ks[3], (fc2_units,), jnp.float32, -blim2, blim2)
    w3 = jax.random.uniform(ks[4], (fc2_units, 1), jnp.float32, -3e-3, 3e-3)
    b3 = jax.random.uniform(ks[5], (1,), jnp.float32, -blim3, blim3)
    return dict(w1=w1, b1=b1, w2=w2, b2=b2, w3=w3, b3=b3,
                state_size=state_size, action_size=action_size,
                fcs1_units=fcs1_units, fc2_units=fc2_units)


def pack_params(raw, *, matmul_dtype=jnp.float32):
    """Build (8,128)-aligned, concat-folded weights for the kernel.

    matmul_dtype=jnp.bfloat16 is the recommended fast path on v5e/v6e/v7x
    (MXU-native operands, f32 accumulation); f32 keeps exact reference parity.
    """
    S, A = raw["state_size"], raw["action_size"]
    H1, H2 = raw["fcs1_units"], raw["fc2_units"]
    IN_PAD = _round_up(S + A, 128)            # 37  -> 128
    H1_PAD = _round_up(H1 + 2 * A, 128)       # 408 -> 512
    H2_PAD = _round_up(H2, 128)               # 300 -> 384

    # W1_ext: state block + identity pass-through of +action / -action.
    w1 = jnp.zeros((IN_PAD, H1_PAD), jnp.float32)
    w1 = w1.at[:S, :H1].set(raw["w1"])
    idx = jnp.arange(A)
    w1 = w1.at[S + idx, H1 + idx].set(1.0)
    w1 = w1.at[S + idx, H1 + A + idx].set(-1.0)

    # Padded bias slots MUST be zero so relu keeps padded lanes exact.
    b1 = jnp.zeros((1, H1_PAD), jnp.float32).at[0, :H1].set(raw["b1"])

    # W2_ext: xs rows, +action rows, -action rows (relu(a)-relu(-a) == a).
    w2 = jnp.zeros((H1_PAD, H2_PAD), jnp.float32)
    w2 = w2.at[:H1, :H2].set(raw["w2"][:H1, :])
    w2 = w2.at[H1:H1 + A, :H2].set(raw["w2"][H1:H1 + A, :])
    w2 = w2.at[H1 + A:H1 + 2 * A, :H2].set(-raw["w2"][H1:H1 + A, :])

    b2 = jnp.zeros((1, H2_PAD), jnp.float32).at[0, :H2].set(raw["b2"])
    w3 = jnp.zeros((1, H2_PAD), jnp.float32).at[0, :H2].set(raw["w3"][:, 0])
    b3 = raw["b3"].astype(jnp.float32)        # (1,), lives in SMEM

    return dict(
        w1=w1.astype(matmul_dtype), b1=b1,    # matmul operands may be bf16
        w2=w2.astype(matmul_dtype), b2=b2,    # biases / w3 / b3 stay f32
        w3=w3, b3=b3,
        state_size=S, action_size=A)


def critic_ref(state, action, raw):
    """Pure-JAX reference matching the PyTorch bn_mode=0 forward."""
    xs = jnp.maximum(state @ raw["w1"] + raw["b1"], 0.0)
    x = jnp.concatenate([xs, action], axis=1)
    x = jnp.maximum(x @ raw["w2"] + raw["b2"], 0.0)
    return x @ raw["w3"] + raw["b3"]


if __name__ == "__main__":
    key = jax.random.PRNGKey(0)
    k_s, k_a, k_p, k_s2, k_a2 = jax.random.split(key, 5)

    state_size = 33      # Reacher-like vector observation size
    action_size = 4      # Reacher-like continuous action size
    raw = init_params(k_p, state_size, action_size)

    # ---- small batch (tb = 8, single grid step, 8-lane output block) -------
    batch = 8
    state = jax.random.normal(k_s, (batch, state_size), jnp.float32)
    action = jax.random.uniform(k_a, (batch, action_size), jnp.float32, -1.0, 1.0)
    q_ref = critic_ref(state, action, raw)

    packed_f32 = pack_params(raw, matmul_dtype=jnp.float32)
    q = jax.block_until_ready(critic_forward(state, action, packed_f32))
    assert q.shape == (batch, 1)
    assert jnp.allclose(q, q_ref, atol=1e-4, rtol=1e-4)

    # bf16-operand / f32-accumulate fast MXU path.
    packed_bf16 = pack_params(raw, matmul_dtype=jnp.bfloat16)
    q16 = jax.block_until_ready(critic_forward(state, action, packed_bf16))
    assert q16.shape == (batch, 1)
    assert bool(jnp.all(jnp.isfinite(q16)))
    assert jnp.allclose(q16, q_ref, atol=5e-2, rtol=5e-2)

    # ---- larger batch (adaptive tile 256, grid of 5, 2x128 lane rows) ------
    batch2 = 1200
    state2 = jax.random.normal(k_s2, (batch2, state_size), jnp.float32)
    action2 = jax.random.uniform(k_a2, (batch2, action_size), jnp.float32, -1.0, 1.0)
    q2_ref = critic_ref(state2, action2, raw)
    q2 = jax.block_until_ready(critic_forward(state2, action2, packed_f32))
    assert q2.shape == (batch2, 1)
    assert jnp.allclose(q2, q2_ref, atol=1e-4, rtol=1e-4)

    print("KERNEL_OK")
</pallas_src>

<mosaic_0001>
module attributes {stable_mosaic.version = 11 : i64} {
  func.func @critic_kernel(%arg0: i32, %arg1: memref<8x128xf32, #tpu.memory_space<vmem>>, %arg2: memref<128x512xf32, #tpu.memory_space<vmem>>, %arg3: memref<1x512xf32, #tpu.memory_space<vmem>>, %arg4: memref<512x384xf32, #tpu.memory_space<vmem>>, %arg5: memref<1x384xf32, #tpu.memory_space<vmem>>, %arg6: memref<1x384xf32, #tpu.memory_space<vmem>>, %arg7: memref<1xf32, #tpu.memory_space<smem>>, %arg8: memref<1x8xf32, #tpu.memory_space<vmem>>, %arg9: memref<8x8xf32, #tpu.memory_space<vmem>>, %arg10: memref<1x1x8xf32, #tpu.memory_space<vmem>>) attributes {dimension_semantics = [#tpu.dimension_semantics<parallel>], iteration_bounds = array<i64: 1>, scalar_prefetch = 0 : i64, scratch_operands = 0 : i64, tpu.core_type = #tpu.core_type<tc>, window_params = [{transform_indices = @transform_0, window_bounds = array<i64: 8, 128>}, {pipeline_mode = #tpu.pipeline_mode<synchronous>, transform_indices = @transform_1, window_bounds = array<i64: 128, 512>}, {pipeline_mode = #tpu.pipeline_mode<synchronous>, transform_indices = @transform_2, window_bounds = array<i64: 1, 512>}, {pipeline_mode = #tpu.pipeline_mode<synchronous>, transform_indices = @transform_3, window_bounds = array<i64: 512, 384>}, {pipeline_mode = #tpu.pipeline_mode<synchronous>, transform_indices = @transform_4, window_bounds = array<i64: 1, 384>}, {pipeline_mode = #tpu.pipeline_mode<synchronous>, transform_indices = @transform_5, window_bounds = array<i64: 1, 384>}, {transform_indices = @transform_6, window_bounds = array<i64: 1>}, {pipeline_mode = #tpu.pipeline_mode<synchronous>, transform_indices = @transform_7, window_bounds = array<i64: 1, 8>}, {pipeline_mode = #tpu.pipeline_mode<synchronous>, transform_indices = @transform_8, window_bounds = array<i64: 8, 8>}, {transform_indices = @transform_9, window_bounds = array<i64: 1, 1, 8>}]} {
    %c0 = arith.constant 0 : index
    %c0_0 = arith.constant 0 : index
    %0 = vector.load %arg1[%c0, %c0_0] : memref<8x128xf32, #tpu.memory_space<vmem>>, vector<8x128xf32>
    %c0_1 = arith.constant 0 : index
    %c0_2 = arith.constant 0 : index
    %1 = vector.load %arg2[%c0_1, %c0_2] : memref<128x512xf32, #tpu.memory_space<vmem>>, vector<128x512xf32>
    %cst = arith.constant dense<0.000000e+00> : vector<8x512xf32>
    %2 = tpu.matmul %0, %1, %cst {dimension_numbers = #tpu.dot_dimension_numbers<[1], [0], [0], [1], [0, 0, 1, 1], [], []>} : vector<8x128xf32>, vector<128x512xf32>, vector<8x512xf32> -> vector<8x512xf32>
    %c0_3 = arith.constant 0 : index
    %c0_4 = arith.constant 0 : index
    %3 = vector.load %arg3[%c0_3, %c0_4] : memref<1x512xf32, #tpu.memory_space<vmem>>, vector<1x512xf32>
    %4 = vector.broadcast %3 : vector<1x512xf32> to vector<8x512xf32>
    %5 = arith.addf %2, %4 : vector<8x512xf32>
    %cst_5 = arith.constant 0.000000e+00 : f32
    %6 = vector.broadcast %cst_5 : f32 to vector<8x512xf32>
    %7 = arith.maximumf %5, %6 : vector<8x512xf32>
    %c0_6 = arith.constant 0 : index
    %c0_7 = arith.constant 0 : index
    %8 = vector.load %arg4[%c0_6, %c0_7] : memref<512x384xf32, #tpu.memory_space<vmem>>, vector<512x384xf32>
    %cst_8 = arith.constant dense<0.000000e+00> : vector<8x384xf32>
    %9 = tpu.matmul %7, %8, %cst_8 {dimension_numbers = #tpu.dot_dimension_numbers<[1], [0], [0], [1], [0, 0, 1, 1], [], []>} : vector<8x512xf32>, vector<512x384xf32>, vector<8x384xf32> -> vector<8x384xf32>
    %c0_9 = arith.constant 0 : index
    %c0_10 = arith.constant 0 : index
    %10 = vector.load %arg5[%c0_9, %c0_10] : memref<1x384xf32, #tpu.memory_space<vmem>>, vector<1x384xf32>
    %11 = vector.broadcast %10 : vector<1x384xf32> to vector<8x384xf32>
    %12 = arith.addf %9, %11 : vector<8x384xf32>
    %cst_11 = arith.constant 0.000000e+00 : f32
    %13 = vector.broadcast %cst_11 : f32 to vector<8x384xf32>
    %14 = arith.maximumf %12, %13 : vector<8x384xf32>
    %c0_12 = arith.constant 0 : index
    %c0_13 = arith.constant 0 : index
    %15 = vector.load %arg6[%c0_12, %c0_13] : memref<1x384xf32, #tpu.memory_space<vmem>>, vector<1x384xf32>
    %16 = vector.broadcast %15 : vector<1x384xf32> to vector<8x384xf32>
    %17 = arith.mulf %14, %16 : vector<8x384xf32>
    %cst_14 = arith.constant dense<0.000000e+00> : vector<8xf32>
    %18 = vector.multi_reduction <add>, %17, %cst_14 [1] : vector<8x384xf32> to vector<8xf32>
    %19 = vector.shape_cast %18 : vector<8xf32> to vector<8x1xf32>
    %c0_15 = arith.constant 0 : index
    %c0_16 = arith.constant 0 : index
    %20 = vector.load %arg8[%c0_15, %c0_16] : memref<1x8xf32, #tpu.memory_space<vmem>>, vector<1x8xf32>
    %c0_17 = arith.constant 0 : index
    %c0_18 = arith.constant 0 : index
    %21 = vector.load %arg9[%c0_17, %c0_18] : memref<8x8xf32, #tpu.memory_space<vmem>>, vector<8x8xf32>
    %22 = vector.broadcast %19 : vector<8x1xf32> to vector<8x8xf32>
    %23 = arith.mulf %22, %21 : vector<8x8xf32>
    %cst_19 = arith.constant dense<0.000000e+00> : vector<1x8xf32>
    %24 = tpu.matmul %20, %23, %cst_19 {dimension_numbers = #tpu.dot_dimension_numbers<[1], [0], [0], [1], [0, 0, 1, 1], [], []>} : vector<1x8xf32>, vector<8x8xf32>, vector<1x8xf32> -> vector<1x8xf32>
    %c0_20 = arith.constant 0 : index
    %25 = memref.load %arg7[%c0_20] : memref<1xf32, #tpu.memory_space<smem>>
    %26 = vector.broadcast %25 : f32 to vector<1x8xf32>
    %27 = arith.addf %24, %26 : vector<1x8xf32>
    %c0_21 = arith.constant 0 : index
    %c0_22 = arith.constant 0 : index
    %c0_23 = arith.constant 0 : index
    %28 = vector.load %arg10[%c0_21, %c0_22, %c0_23] : memref<1x1x8xf32, #tpu.memory_space<vmem>>, vector<1x1x8xf32>
    %29 = vector.shape_cast %28 : vector<1x1x8xf32> to vector<1x8xf32>
    %30 = vector.shape_cast %27 : vector<1x8xf32> to vector<1x1x8xf32>
    tpu.vector_store %arg10[%c0_21, %c0_22, %c0_23], %30 {strides = array<i32>} : memref<1x1x8xf32, #tpu.memory_space<vmem>>, vector<1x1x8xf32>,
    return
  }
  func.func @transform_0(%arg0: i32) -> (i32, i32) {
    %c0_i32 = arith.constant 0 : i32
    %c0_i32_0 = arith.constant 0 : i32
    return %arg0, %c0_i32 : i32, i32
  }
  func.func @transform_1(%arg0: i32) -> (i32, i32) {
    %c0_i32 = arith.constant 0 : i32
    %c0_i32_0 = arith.constant 0 : i32
    %c0_i32_1 = arith.constant 0 : i32
    return %c0_i32, %c0_i32_0 : i32, i32
  }
  func.func @transform_2(%arg0: i32) -> (i32, i32) {
    %c0_i32 = arith.constant 0 : i32
    %c0_i32_0 = arith.constant 0 : i32
    %c0_i32_1 = arith.constant 0 : i32
    return %c0_i32, %c0_i32_0 : i32, i32
  }
  func.func @transform_3(%arg0: i32) -> (i32, i32) {
    %c0_i32 = arith.constant 0 : i32
    %c0_i32_0 = arith.constant 0 : i32
    %c0_i32_1 = arith.constant 0 : i32
    return %c0_i32, %c0_i32_0 : i32, i32
  }
  func.func @transform_4(%arg0: i32) -> (i32, i32) {
    %c0_i32 = arith.constant 0 : i32
    %c0_i32_0 = arith.constant 0 : i32
    %c0_i32_1 = arith.constant 0 : i32
    return %c0_i32, %c0_i32_0 : i32, i32
  }
  func.func @transform_5(%arg0: i32) -> (i32, i32) {
    %c0_i32 = arith.constant 0 : i32
    %c0_i32_0 = arith.constant 0 : i32
    %c0_i32_1 = arith.constant 0 : i32
    return %c0_i32, %c0_i32_0 : i32, i32
  }
  func.func @transform_6(%arg0: i32) -> i32 {
    %c0_i32 = arith.constant 0 : i32
    %c0_i32_0 = arith.constant 0 : i32
    return %c0_i32 : i32
  }
  func.func @transform_7(%arg0: i32) -> (i32, i32) {
    %c0_i32 = arith.constant 0 : i32
    %c0_i32_0 = arith.constant 0 : i32
    %c0_i32_1 = arith.constant 0 : i32
    return %c0_i32, %c0_i32_0 : i32, i32
  }
  func.func @transform_8(%arg0: i32) -> (i32, i32) {
    %c0_i32 = arith.constant 0 : i32
    %c0_i32_0 = arith.constant 0 : i32
    %c0_i32_1 = arith.constant 0 : i32
    return %c0_i32, %c0_i32_0 : i32, i32
  }
  func.func @transform_9(%arg0: i32) -> (i32, i32, i32) {
    %c0_i32 = arith.constant 0 : i32
    %c0_i32_0 = arith.constant 0 : i32
    %c0_i32_1 = arith.constant 0 : i32
    return %arg0, %c0_i32, %c0_i32_0 : i32, i32, i32
  }
}

</mosaic_0001>

<llo_original>
// kernel: tpu_custom_call.1
$region0: #{tpu_custom_call.1}
  #allocation0 [shape = 'u32[]', space=smem, size = 0x4, offset = 0x4, fixed_abs, tag = 'smem constant byte address 0x4 - core index']
  #allocation1 [shape = 'u32[144,128]{1,0:T(1,128)}', space=vmem, size = 0x12000, scoped, tag = 'internal scratch']
  #allocation2 [shape = 'f32[1]{0:T(128)S(6)}', space=smem, size = 0x200, scoped, tag = 'scoped memory for tpu_custom_call.1']
  %s0 = inlined_call_operand.hbm [shape: f32[8,128], index: 0, kind: input, shape index: {}]
  %s1 = inlined_call_operand.hbm [shape: f32[128,512], index: 1, kind: input, shape index: {}]
  %s2 = inlined_call_operand.vmem [shape: f32[1,512], index: 2, kind: input, shape index: {}]
  %s3 = inlined_call_operand.hbm [shape: f32[512,384], index: 3, kind: input, shape index: {}]
  %s4 = inlined_call_operand.hbm [shape: f32[1,384], index: 4, kind: input, shape index: {}]
  %s5 = inlined_call_operand.hbm [shape: f32[1,384], index: 5, kind: input, shape index: {}]
  %s6 = inlined_call_operand.<no memory space> [shape: f32[1], index: 6, kind: input, shape index: {}]
  %s7 = inlined_call_operand.vmem [shape: f32[1,8], index: 7, kind: input, shape index: {}]
  %s8 = inlined_call_operand.vmem [shape: f32[8,8], index: 8, kind: input, shape index: {}]
  %s9 = inlined_call_operand.hbm [shape: f32[1,1,8], index: 9, kind: output, shape index: {}]
  %s10 = sld [smem:[#allocation0]]
  $region66: #{tpu_custom_call.1} parent=0
    _
  %s12 = ssub.s32 1, %s10
  %s13 = scalar_select 0, %s12, %s10
  %14 = sst [smem:[#allocation2]] %s6
  $region1: #{tpu_custom_call.1} parent=0
    #allocation3 [shape = 'u8[4096]{0}', space=vmem, size = 0x1000, scoped, tag = 'input window, operand 0, single buffered']
    #allocation4 [shape = 's32[1]{0}', space=sflag, size = 0x4, scoped, tag = 'scoped memory for tpu_custom_call.1']
    #allocation5 [shape = 's32[1]{0}', space=sflag, size = 0x4, scoped, tag = 'scoped memory for tpu_custom_call.1']
    #allocation6 [shape = 'u8[262144]{0}', space=vmem, size = 0x40000, scoped, tag = 'input window, operand 1, single buffered']
    #allocation7 [shape = 's32[1]{0}', space=sflag, size = 0x4, scoped, tag = 'scoped memory for tpu_custom_call.1']
    #allocation8 [shape = 'u8[786432]{0}', space=vmem, size = 0xc0000, scoped, tag = 'input window, operand 3, single buffered']
    #allocation9 [shape = 'u8[1536]{0}', space=vmem, size = 0x800, scoped, tag = 'input window, operand 4, single buffered']
    #allocation10 [shape = 's32[1]{0}', space=sflag, size = 0x4, scoped, tag = 'scoped memory for tpu_custom_call.1']
    #allocation11 [shape = 'u8[1536]{0}', space=vmem, size = 0x800, scoped, tag = 'input window, operand 5, single buffered']
    #allocation12 [shape = 'u8[512]{0}', space=vmem, size = 0x400, scoped, tag = 'output window, operand 0, single buffered']
    %15 = vsyncpa [#allocation4], 0
    %16 = vsyncpa [#allocation7], 0
    %17 = vsyncpa [#allocation10], 0
    %18 = vsyncpa [#allocation5], 0
    // Predicated region
    $region2: #{tpu_custom_call.1} parent=1 // pred_check
      _
    $region3: #{tpu_custom_call.1} parent=1 // pred_check_branch
      %20 = sbr.rel (0) target = $region5
    $region4: #{tpu_custom_call.1} parent=1 // pred_region
      %s22 = ssub.s32 128, 128
      %23 = vsyncadd [#allocation4], %s22
      %s25 = sshll.u32 [#allocation3], 4
      %s26 = int_to_ptr.vmem [resolvable:$true] %s25
      %28 = dma.hbm_to_vmem [thread:$0]  %s0, 128, %s26, [#allocation4]
    $region5: #{tpu_custom_call.1} parent=1 // pred_fallthru
      _
    // Predicated region
    $region6: #{tpu_custom_call.1} parent=1 // pred_check
      _
    $region7: #{tpu_custom_call.1} parent=1 // pred_check_branch
      %30 = sbr.rel (0) target = $region9
    $region8: #{tpu_custom_call.1} parent=1 // pred_region
      %s32 = ssub.s32 8192, 8192
      %33 = vsyncadd [#allocation7], %s32
      %s34 = sshll.u32 [#allocation6], 4
      %s35 = int_to_ptr.vmem [resolvable:$true] %s34
      %40 = dma.hbm_to_vmem [thread:$0]  %s1, 8192, %s35, [#allocation7], 512, 512, 32
    $region9: #{tpu_custom_call.1} parent=1 // pred_fallthru
      _
    // Predicated region
    $region10: #{tpu_custom_call.1} parent=1 // pred_check
      _
    $region11: #{tpu_custom_call.1} parent=1 // pred_check_branch
      %42 = sbr.rel (0) target = $region13
    $region12: #{tpu_custom_call.1} parent=1 // pred_region
      _
    $region13: #{tpu_custom_call.1} parent=1 // pred_fallthru
      _
    // Predicated region
    $region14: #{tpu_custom_call.1} parent=1 // pred_check
      _
    $region15: #{tpu_custom_call.1} parent=1 // pred_check_branch
      %44 = sbr.rel (0) target = $region17
    $region16: #{tpu_custom_call.1} parent=1 // pred_region
      %s46 = ssub.s32 24576, 24576
      %47 = vsyncadd [#allocation7], %s46
      %s48 = sshll.u32 [#allocation8], 4
      %s49 = int_to_ptr.vmem [resolvable:$true] %s48
      %54 = dma.hbm_to_vmem [thread:$0]  %s3, 24576, %s49, [#allocation7], 384, 384, 24
    $region17: #{tpu_custom_call.1} parent=1 // pred_fallthru
      _
    // Predicated region
    $region18: #{tpu_custom_call.1} parent=1 // pred_check
      _
    $region19: #{tpu_custom_call.1} parent=1 // pred_check_branch
      %56 = sbr.rel (0) target = $region21
    $region20: #{tpu_custom_call.1} parent=1 // pred_region
      %s58 = ssub.s32 48, 48
      %59 = vsyncadd [#allocation10], %s58
      %s61 = sshll.u32 [#allocation9], 4
      %s62 = int_to_ptr.vmem [resolvable:$true] %s61
      %64 = dma.hbm_to_vmem [thread:$0]  %s4, 48, %s62, [#allocation10]
    $region21: #{tpu_custom_call.1} parent=1 // pred_fallthru
      _
    // Predicated region
    $region22: #{tpu_custom_call.1} parent=1 // pred_check
      _
    $region23: #{tpu_custom_call.1} parent=1 // pred_check_branch
      %66 = sbr.rel (0) target = $region25
    $region24: #{tpu_custom_call.1} parent=1 // pred_region
      %s68 = ssub.s32 48, 48
      %69 = vsyncadd [#allocation10], %s68
      %s71 = sshll.u32 [#allocation11], 4
      %s72 = int_to_ptr.vmem [resolvable:$true] %s71
      %74 = dma.hbm_to_vmem [thread:$0]  %s5, 48, %s72, [#allocation10]
    $region25: #{tpu_custom_call.1} parent=1 // pred_fallthru
      _
    // Predicated region
    $region26: #{tpu_custom_call.1} parent=1 // pred_check
      _
    $region27: #{tpu_custom_call.1} parent=1 // pred_check_branch
      %76 = sbr.rel (0) target = $region29
    $region28: #{tpu_custom_call.1} parent=1 // pred_region
      _
    $region29: #{tpu_custom_call.1} parent=1 // pred_fallthru
      _
    // Predicated region
    $region30: #{tpu_custom_call.1} parent=1 // pred_check
      _
    $region31: #{tpu_custom_call.1} parent=1 // pred_check_branch
      %78 = sbr.rel (0) target = $region33
    $region32: #{tpu_custom_call.1} parent=1 // pred_region
      _
    $region33: #{tpu_custom_call.1} parent=1 // pred_fallthru
      _
    // Predicated region
    $region34: #{tpu_custom_call.1} parent=1 // pred_check
      _
    $region35: #{tpu_custom_call.1} parent=1 // pred_check_branch
      %80 = sbr.rel (0) target = $region37
    $region36: #{tpu_custom_call.1} parent=1 // pred_region
      _
    $region37: #{tpu_custom_call.1} parent=1 // pred_fallthru
      _
    // Predicated region
    $region38: #{tpu_custom_call.1} parent=1 // pred_check
      _
    $region39: #{tpu_custom_call.1} parent=1 // pred_check_branch
      %82 = sbr.rel (0) target = $region41
    $region40: #{tpu_custom_call.1} parent=1 // pred_region
      %83 = dma.done [#allocation4], 128
    $region41: #{tpu_custom_call.1} parent=1 // pred_fallthru
      _
    // Predicated region
    $region42: #{tpu_custom_call.1} parent=1 // pred_check
      _
    $region43: #{tpu_custom_call.1} parent=1 // pred_check_branch
      %85 = sbr.rel (0) target = $region45
    $region44: #{tpu_custom_call.1} parent=1 // pred_region
      %86 = dma.done [#allocation7], 8192
    $region45: #{tpu_custom_call.1} parent=1 // pred_fallthru
      _
    // Predicated region
    $region46: #{tpu_custom_call.1} parent=1 // pred_check
      _
    $region47: #{tpu_custom_call.1} parent=1 // pred_check_branch
      %88 = sbr.rel (0) target = $region49
    $region48: #{tpu_custom_call.1} parent=1 // pred_region
      %89 = dma.done [#allocation7], 24576
    $region49: #{tpu_custom_call.1} parent=1 // pred_fallthru
      _
    // Predicated region
    $region50: #{tpu_custom_call.1} parent=1 // pred_check
      _
    $region51: #{tpu_custom_call.1} parent=1 // pred_check_branch
      %91 = sbr.rel (0) target = $region53
    $region52: #{tpu_custom_call.1} parent=1 // pred_region
      %92 = dma.done [#allocation10], 48
    $region53: #{tpu_custom_call.1} parent=1 // pred_fallthru
      _
    // Predicated region
    $region54: #{tpu_custom_call.1} parent=1 // pred_check
      _
    $region55: #{tpu_custom_call.1} parent=1 // pred_check_branch
      %94 = sbr.rel (0) target = $region57
    $region56: #{tpu_custom_call.1} parent=1 // pred_region
      %95 = dma.done [#allocation10], 48
    $region57: #{tpu_custom_call.1} parent=1 // pred_fallthru
      _
    %v96 = vld [vmem:[#allocation3] sm:$0xff]
    %v97 = vld [vmem:[#allocation6] sm:$0xff]
    %v98 = vld [vmem:[#allocation6 + $0x8] sm:$0xff]
    %v99 = vld [vmem:[#allocation6 + $0x10] sm:$0xff]
    %v100 = vld [vmem:[#allocation6 + $0x18] sm:$0xff]
    %v101 = vld [vmem:[#allocation6 + $0x20] sm:$0xff]
    %v102 = vld [vmem:[#allocation6 + $0x28] sm:$0xff]
    %v103 = vld [vmem:[#allocation6 + $0x30] sm:$0xff]
    %v104 = vld [vmem:[#allocation6 + $0x38] sm:$0xff]
    %v105 = vld [vmem:[#allocation6 + $0x40] sm:$0xff]
    %v106 = vld [vmem:[#allocation6 + $0x48] sm:$0xff]
    %v107 = vld [vmem:[#allocation6 + $0x50] sm:$0xff]
    %v108 = vld [vmem:[#allocation6 + $0x58] sm:$0xff]
    %v109 = vld [vmem:[#allocation6 + $0x60] sm:$0xff]
    %v110 = vld [vmem:[#allocation6 + $0x68] sm:$0xff]
    %v111 = vld [vmem:[#allocation6 + $0x70] sm:$0xff]
    %v112 = vld [vmem:[#allocation6 + $0x78] sm:$0xff]
    %v113 = vld [vmem:[#allocation6 + $0x80] sm:$0xff]
    %v114 = vld [vmem:[#allocation6 + $0x88] sm:$0xff]
    %v115 = vld [vmem:[#allocation6 + $0x90] sm:$0xff]
    %v116 = vld [vmem:[#allocation6 + $0x98] sm:$0xff]
    %v117 = vld [vmem:[#allocation6 + $0xa0] sm:$0xff]
    %v118 = vld [vmem:[#allocation6 + $0xa8] sm:$0xff]
    %v119 = vld [vmem:[#allocation6 + $0xb0] sm:$0xff]
    %v120 = vld [vmem:[#allocation6 + $0xb8] sm:$0xff]
    %v121 = vld [vmem:[#allocation6 + $0xc0] sm:$0xff]
    %v122 = vld [vmem:[#allocation6 + $0xc8] sm:$0xff]
    %v123 = vld [vmem:[#allocation6 + $0xd0] sm:$0xff]
    %v124 = vld [vmem:[#allocation6 + $0xd8] sm:$0xff]
    %v125 = vld [vmem:[#allocation6 + $0xe0] sm:$0xff]
    %v126 = vld [vmem:[#allocation6 + $0xe8] sm:$0xff]
    %v127 = vld [vmem:[#allocation6 + $0xf0] sm:$0xff]
    %v128 = vld [vmem:[#allocation6 + $0xf8] sm:$0xff]
    %v129 = vld [vmem:[#allocation6 + $0x100] sm:$0xff]
    %v130 = vld [vmem:[#allocation6 + $0x108] sm:$0xff]
    %v131 = vld [vmem:[#allocation6 + $0x110] sm:$0xff]
    %v132 = vld [vmem:[#allocation6 + $0x118] sm:$0xff]
    %v133 = vld [vmem:[#allocation6 + $0x120] sm:$0xff]
    %v134 = vld [vmem:[#allocation6 + $0x128] sm:$0xff]
    %v135 = vld [vmem:[#allocation6 + $0x130] sm:$0xff]
    %v136 = vld [vmem:[#allocation6 + $0x138] sm:$0xff]
    %v137 = vld [vmem:[#allocation6 + $0x140] sm:$0xff]
    %v138 = vld [vmem:[#allocation6 + $0x148] sm:$0xff]
    %v139 = vld [vmem:[#allocation6 + $0x150] sm:$0xff]
    %v140 = vld [vmem:[#allocation6 + $0x158] sm:$0xff]
    %v141 = vld [vmem:[#allocation6 + $0x160] sm:$0xff]
    %v142 = vld [vmem:[#allocation6 + $0x168] sm:$0xff]
    %v143 = vld [vmem:[#allocation6 + $0x170] sm:$0xff]
    %v144 = vld [vmem:[#allocation6 + $0x178] sm:$0xff]
    %v145 = vld [vmem:[#allocation6 + $0x180] sm:$0xff]
    %v146 = vld [vmem:[#allocation6 + $0x188] sm:$0xff]
    %v147 = vld [vmem:[#allocation6 + $0x190] sm:$0xff]
    %v148 = vld [vmem:[#allocation6 + $0x198] sm:$0xff]
    %v149 = vld [vmem:[#allocation6 + $0x1a0] sm:$0xff]
    %v150 = vld [vmem:[#allocation6 + $0x1a8] sm:$0xff]
    %v151 = vld [vmem:[#allocation6 + $0x1b0] sm:$0xff]
    %v152 = vld [vmem:[#allocation6 + $0x1b8] sm:$0xff]
    %v153 = vld [vmem:[#allocation6 + $0x1c0] sm:$0xff]
    %v154 = vld [vmem:[#allocation6 + $0x1c8] sm:$0xff]
    %v155 = vld [vmem:[#allocation6 + $0x1d0] sm:$0xff]
    %v156 = vld [vmem:[#allocation6 + $0x1d8] sm:$0xff]
    %v157 = vld [vmem:[#allocation6 + $0x1e0] sm:$0xff]
    %v158 = vld [vmem:[#allocation6 + $0x1e8] sm:$0xff]
    %v159 = vld [vmem:[#allocation6 + $0x1f0] sm:$0xff]
    %v160 = vld [vmem:[#allocation6 + $0x1f8] sm:$0xff]
    %v161 = vld [vmem:[%s2] sm:$0xf]
    %v163 = vlaneseq
    %v164 = vshrl.u32 %v163, 7
    %v165 = vsub.s32 0, %v164
    %v166 = vrot.slane %v161, %v165
    %v167 = vlaneseq
    %v168 = vshrl.u32 %v167, 7
    %v169 = vsub.s32 1, %v168
    %v170 = vrot.slane %v161, %v169
    %v171 = vlaneseq
    %v172 = vshrl.u32 %v171, 7
    %v173 = vsub.s32 2, %v172
    %v174 = vrot.slane %v161, %v173
    %v175 = vlaneseq
    %v176 = vshrl.u32 %v175, 7
    %v177 = vsub.s32 3, %v176
    %v178 = vrot.slane %v161, %v177
    %183 = vmatprep.subr.mxu0 %v158
    %184 = vmatpush1.msra.mxu0 %v157
    %185 = vmatprep.subr.mxu0 %v154
    %186 = vmatpush1.msra.mxu0 %v153
    %187 = vmatprep.subr.mxu0 %v150
    %188 = vmatpush1.msra.mxu0 %v149
    %189 = vmatprep.subr.mxu0 %v146
    %190 = vmatpush1.msra.mxu0 %v145
    %191 = vmatprep.subr.mxu0 %v142
    %192 = vmatpush1.msra.mxu0 %v141
    %193 = vmatprep.subr.mxu0 %v138
    %194 = vmatpush1.msra.mxu0 %v137
    %195 = vmatprep.subr.mxu0 %v134
    %196 = vmatpush1.msra.mxu0 %v133
    %197 = vmatprep.subr.mxu0 %v130
    %198 = vmatpush1.msra.mxu0 %v129
    %199 = vmatprep.subr.mxu0 %v126
    %200 = vmatpush1.msra.mxu0 %v125
    %201 = vmatprep.subr.mxu0 %v122
    %202 = vmatpush1.msra.mxu0 %v121
    %203 = vmatprep.subr.mxu0 %v118
    %204 = vmatpush1.msra.mxu0 %v117
    %205 = vmatprep.subr.mxu0 %v114
    %206 = vmatpush1.msra.mxu0 %v113
    %207 = vmatprep.subr.mxu0 %v110
    %208 = vmatpush1.msra.mxu0 %v109
    %209 = vmatprep.subr.mxu0 %v106
    %210 = vmatpush1.msra.mxu0 %v105
    %211 = vmatprep.subr.mxu0 %v102
    %212 = vmatpush1.msra.mxu0 %v101
    %213 = vmatprep.subr.mxu0 %v98
    %214 = vmatpush1.msra.mxu0 %v97
    %215 = vmatprep.subr.mxu0 0.0
    %216 = vmatpush2.msra.mxu0 0.0
    %217 = vmatprep.subr.mxu0 0.0
    %218 = vmatpush2.msra.mxu0 0.0
    %219 = vmatprep.subr.mxu0 0.0
    %220 = vmatpush2.msra.mxu0 0.0
    %221 = vmatprep.subr.mxu0 0.0
    %222 = vmatpush2.msra.mxu0 0.0
    %223 = vmatprep.subr.mxu0 0.0
    %224 = vmatpush2.msra.mxu0 0.0
    %225 = vmatprep.subr.mxu0 0.0
    %226 = vmatpush2.msra.mxu0 0.0
    %227 = vmatprep.subr.mxu0 0.0
    %228 = vmatpush2.msra.mxu0 0.0
    %229 = vmatprep.subr.mxu0 0.0
    %230 = vmatpush2.msra.mxu0 0.0
    %231 = vmatprep.subr.mxu0 0.0
    %232 = vmatpush2.msra.mxu0 0.0
    %233 = vmatprep.subr.mxu0 0.0
    %234 = vmatpush2.msra.mxu0 0.0
    %235 = vmatprep.subr.mxu0 0.0
    %236 = vmatpush2.msra.mxu0 0.0
    %237 = vmatprep.subr.mxu0 0.0
    %238 = vmatpush2.msra.mxu0 0.0
    %239 = vmatprep.subr.mxu0 0.0
    %240 = vmatpush2.msra.mxu0 0.0
    %241 = vmatprep.subr.mxu0 0.0
    %242 = vmatpush2.msra.mxu0 0.0
    %243 = vmatprep.subr.mxu0 0.0
    %244 = vmatpush2.msra.mxu0 0.0
    %245 = vmatprep.subr.mxu0 0.0
    %246 = vmatpush2.msra.mxu0 0.0
    %247 = vmatprep.mubr.f32.mxu0 0.0
    %248 = vmatmul.mubr.f32.gmra.mxu0 %v96
    %v249 = vpop.f32.mrf.mxu0
    %v250 = vadd.f32 %v166, %v249
    %v251 = vpop.f32.mrf.mxu0
    %v252 = vadd.f32 %v170, %v251
    %253 = vdwg.mxu0
    %254 = vmatprep.subr.mxu0 %v160
    %255 = vmatpush1.msra.mxu0 %v159
    %256 = vmatprep.subr.mxu0 %v156
    %257 = vmatpush1.msra.mxu0 %v155
    %258 = vmatprep.subr.mxu0 %v152
    %259 = vmatpush1.msra.mxu0 %v151
    %260 = vmatprep.subr.mxu0 %v148
    %261 = vmatpush1.msra.mxu0 %v147
    %262 = vmatprep.subr.mxu0 %v144
    %263 = vmatpush1.msra.mxu0 %v143
    %264 = vmatprep.subr.mxu0 %v140
    %265 = vmatpush1.msra.mxu0 %v139
    %266 = vmatprep.subr.mxu0 %v136
    %267 = vmatpush1.msra.mxu0 %v135
    %268 = vmatprep.subr.mxu0 %v132
    %269 = vmatpush1.msra.mxu0 %v131
    %270 = vmatprep.subr.mxu0 %v128
    %271 = vmatpush1.msra.mxu0 %v127
    %272 = vmatprep.subr.mxu0 %v124
    %273 = vmatpush1.msra.mxu0 %v123
    %274 = vmatprep.subr.mxu0 %v120
    %275 = vmatpush1.msra.mxu0 %v119
    %276 = vmatprep.subr.mxu0 %v116
    %277 = vmatpush1.msra.mxu0 %v115
    %278 = vmatprep.subr.mxu0 %v112
    %279 = vmatpush1.msra.mxu0 %v111
    %280 = vmatprep.subr.mxu0 %v108
    %281 = vmatpush1.msra.mxu0 %v107
    %282 = vmatprep.subr.mxu0 %v104
    %283 = vmatpush1.msra.mxu0 %v103
    %284 = vmatprep.subr.mxu0 %v100
    %285 = vmatpush1.msra.mxu0 %v99
    %286 = vmatprep.subr.mxu0 0.0
    %287 = vmatpush2.msra.mxu0 0.0
    %288 = vmatprep.subr.mxu0 0.0
    %289 = vmatpush2.msra.mxu0 0.0
    %290 = vmatprep.subr.mxu0 0.0
    %291 = vmatpush2.msra.mxu0 0.0
    %292 = vmatprep.subr.mxu0 0.0
    %293 = vmatpush2.msra.mxu0 0.0
    %294 = vmatprep.subr.mxu0 0.0
    %295 = vmatpush2.msra.mxu0 0.0
    %296 = vmatprep.subr.mxu0 0.0
    %297 = vmatpush2.msra.mxu0 0.0
    %298 = vmatprep.subr.mxu0 0.0
    %299 = vmatpush2.msra.mxu0 0.0
    %300 = vmatprep.subr.mxu0 0.0
    %301 = vmatpush2.msra.mxu0 0.0
    %302 = vmatprep.subr.mxu0 0.0
    %303 = vmatpush2.msra.mxu0 0.0
    %304 = vmatprep.subr.mxu0 0.0
    %305 = vmatpush2.msra.mxu0 0.0
    %306 = vmatprep.subr.mxu0 0.0
    %307 = vmatpush2.msra.mxu0 0.0
    %308 = vmatprep.subr.mxu0 0.0
    %309 = vmatpush2.msra.mxu0 0.0
    %310 = vmatprep.subr.mxu0 0.0
    %311 = vmatpush2.msra.mxu0 0.0
    %312 = vmatprep.subr.mxu0 0.0
    %313 = vmatpush2.msra.mxu0 0.0
    %314 = vmatprep.subr.mxu0 0.0
    %315 = vmatpush2.msra.mxu0 0.0
    %316 = vmatprep.subr.mxu0 0.0
    %317 = vmatpush2.msra.mxu0 0.0
    %318 = vmatprep.mubr.f32.mxu0 0.0
    %319 = vmatmul.mubr.f32.gmra.mxu0 %v96
    %v320 = vpop.f32.mrf.mxu0
    %v321 = vadd.f32 %v174, %v320
    %v322 = vpop.f32.mrf.mxu0
    %v323 = vadd.f32 %v178, %v322
    %324 = vdwg.mxu0
    %v325 = vmax.f32 %v250, 0.0
    %v326 = vmax.f32 %v252, 0.0
    %v327 = vmax.f32 %v321, 0.0
    %v328 = vmax.f32 %v323, 0.0
    %v329 = vld [vmem:[#allocation8] sm:$0xff]
    %v330 = vld [vmem:[#allocation8 + $0x8] sm:$0xff]
    %v331 = vld [vmem:[#allocation8 + $0x10] sm:$0xff]
    %v332 = vld [vmem:[#allocation8 + $0x18] sm:$0xff]
    %v333 = vld [vmem:[#allocation8 + $0x20] sm:$0xff]
    %v334 = vld [vmem:[#allocation8 + $0x28] sm:$0xff]
    %v335 = vld [vmem:[#allocation8 + $0x30] sm:$0xff]
    %v336 = vld [vmem:[#allocation8 + $0x38] sm:$0xff]
    %v337 = vld [vmem:[#allocation8 + $0x40] sm:$0xff]
    %v338 = vld [vmem:[#allocation8 + $0x48] sm:$0xff]
    %v339 = vld [vmem:[#allocation8 + $0x50] sm:$0xff]
    %v340 = vld [vmem:[#allocation8 + $0x58] sm:$0xff]
    %v341 = vld [vmem:[#allocation8 + $0x60] sm:$0xff]
    %v342 = vld [vmem:[#allocation8 + $0x68] sm:$0xff]
    %v343 = vld [vmem:[#allocation8 + $0x70] sm:$0xff]
    %v344 = vld [vmem:[#allocation8 + $0x78] sm:$0xff]
    %v345 = vld [vmem:[#allocation8 + $0x80] sm:$0xff]
    %v346 = vld [vmem:[#allocation8 + $0x88] sm:$0xff]
    %v347 = vld [vmem:[#allocation8 + $0x90] sm:$0xff]
    %v348 = vld [vmem:[#allocation8 + $0x98] sm:$0xff]
    %v349 = vld [vmem:[#allocation8 + $0xa0] sm:$0xff]
    %v350 = vld [vmem:[#allocation8 + $0xa8] sm:$0xff]
    %v351 = vld [vmem:[#allocation8 + $0xb0] sm:$0xff]
    %v352 = vld [vmem:[#allocation8 + $0xb8] sm:$0xff]
    %v353 = vld [vmem:[#allocation8 + $0xc0] sm:$0xff]
    %v354 = vld [vmem:[#allocation8 + $0xc8] sm:$0xff]
    %v355 = vld [vmem:[#allocation8 + $0xd0] sm:$0xff]
    %v356 = vld [vmem:[#allocation8 + $0xd8] sm:$0xff]
    %v357 = vld [vmem:[#allocation8 + $0xe0] sm:$0xff]
    %v358 = vld [vmem:[#allocation8 + $0xe8] sm:$0xff]
    %v359 = vld [vmem:[#allocation8 + $0xf0] sm:$0xff]
    %v360 = vld [vmem:[#allocation8 + $0xf8] sm:$0xff]
    %v361 = vld [vmem:[#allocation8 + $0x100] sm:$0xff]
    %v362 = vld [vmem:[#allocation8 + $0x108] sm:$0xff]
    %v363 = vld [vmem:[#allocation8 + $0x110] sm:$0xff]
    %v364 = vld [vmem:[#allocation8 + $0x118] sm:$0xff]
    %v365 = vld [vmem:[#allocation8 + $0x120] sm:$0xff]
    %v366 = vld [vmem:[#allocation8 + $0x128] sm:$0xff]
    %v367 = vld [vmem:[#allocation8 + $0x130] sm:$0xff]
    %v368 = vld [vmem:[#allocation8 + $0x138] sm:$0xff]
    %v369 = vld [vmem:[#allocation8 + $0x140] sm:$0xff]
    %v370 = vld [vmem:[#allocation8 + $0x148] sm:$0xff]
    %v371 = vld [vmem:[#allocation8 + $0x150] sm:$0xff]
    %v372 = vld [vmem:[#allocation8 + $0x158] sm:$0xff]
    %v373 = vld [vmem:[#allocation8 + $0x160] sm:$0xff]
    %v374 = vld [vmem:[#allocation8 + $0x168] sm:$0xff]
    %v375 = vld [vmem:[#allocation8 + $0x170] sm:$0xff]
    %v376 = vld [vmem:[#allocation8 + $0x178] sm:$0xff]
    %v377 = vld [vmem:[#allocation8 + $0x180] sm:$0xff]
    %v378 = vld [vmem:[#allocation8 + $0x188] sm:$0xff]
    %v379 = vld [vmem:[#allocation8 + $0x190] sm:$0xff]
    %v380 = vld [vmem:[#allocation8 + $0x198] sm:$0xff]
    %v381 = vld [vmem:[#allocation8 + $0x1a0] sm:$0xff]
    %v382 = vld [vmem:[#allocation8 + $0x1a8] sm:$0xff]
    %v383 = vld [vmem:[#allocation8 + $0x1b0] sm:$0xff]
    %v384 = vld [vmem:[#allocation8 + $0x1b8] sm:$0xff]
    %v385 = vld [vmem:[#allocation8 + $0x1c0] sm:$0xff]
    %v386 = vld [vmem:[#allocation8 + $0x1c8] sm:$0xff]
    %v387 = vld [vmem:[#allocation8 + $0x1d0] sm:$0xff]
    %v388 = vld [vmem:[#allocation8 + $0x1d8] sm:$0xff]
    %v389 = vld [vmem:[#allocation8 + $0x1e0] sm:$0xff]
    %v390 = vld [vmem:[#allocation8 + $0x1e8] sm:$0xff]
    %v391 = vld [vmem:[#allocation8 + $0x1f0] sm:$0xff]
    %v392 = vld [vmem:[#allocation8 + $0x1f8] sm:$0xff]
    %v393 = vld [vmem:[#allocation8 + $0x200] sm:$0xff]
    %v394 = vld [vmem:[#allocation8 + $0x208] sm:$0xff]
    %v395 = vld [vmem:[#allocation8 + $0x210] sm:$0xff]
    %v396 = vld [vmem:[#allocation8 + $0x218] sm:$0xff]
    %v397 = vld [vmem:[#allocation8 + $0x220] sm:$0xff]
    %v398 = vld [vmem:[#allocation8 + $0x228] sm:$0xff]
    %v399 = vld [vmem:[#allocation8 + $0x230] sm:$0xff]
    %v400 = vld [vmem:[#allocation8 + $0x238] sm:$0xff]
    %v401 = vld [vmem:[#allocation8 + $0x240] sm:$0xff]
    %v402 = vld [vmem:[#allocation8 + $0x248] sm:$0xff]
    %v403 = vld [vmem:[#allocation8 + $0x250] sm:$0xff]
    %v404 = vld [vmem:[#allocation8 + $0x258] sm:$0xff]
    %v405 = vld [vmem:[#allocation8 + $0x260] sm:$0xff]
    %v406 = vld [vmem:[#allocation8 + $0x268] sm:$0xff]
    %v407 = vld [vmem:[#allocation8 + $0x270] sm:$0xff]
    %v408 = vld [vmem:[#allocation8 + $0x278] sm:$0xff]
    %v409 = vld [vmem:[#allocation8 + $0x280] sm:$0xff]
    %v410 = vld [vmem:[#allocation8 + $0x288] sm:$0xff]
    %v411 = vld [vmem:[#allocation8 + $0x290] sm:$0xff]
    %v412 = vld [vmem:[#allocation8 + $0x298] sm:$0xff]
    %v413 = vld [vmem:[#allocation8 + $0x2a0] sm:$0xff]
    %v414 = vld [vmem:[#allocation8 + $0x2a8] sm:$0xff]
    %v415 = vld [vmem:[#allocation8 + $0x2b0] sm:$0xff]
    %v416 = vld [vmem:[#allocation8 + $0x2b8] sm:$0xff]
    %v417 = vld [vmem:[#allocation8 + $0x2c0] sm:$0xff]
    %v418 = vld [vmem:[#allocation8 + $0x2c8] sm:$0xff]
    %v419 = vld [vmem:[#allocation8 + $0x2d0] sm:$0xff]
    %v420 = vld [vmem:[#allocation8 + $0x2d8] sm:$0xff]
    %v421 = vld [vmem:[#allocation8 + $0x2e0] sm:$0xff]
    %v422 = vld [vmem:[#allocation8 + $0x2e8] sm:$0xff]
    %v423 = vld [vmem:[#allocation8 + $0x2f0] sm:$0xff]
    %v424 = vld [vmem:[#allocation8 + $0x2f8] sm:$0xff]
    %v425 = vld [vmem:[#allocation8 + $0x300] sm:$0xff]
    %v426 = vld [vmem:[#allocation8 + $0x308] sm:$0xff]
    %v427 = vld [vmem:[#allocation8 + $0x310] sm:$0xff]
    %v428 = vld [vmem:[#allocation8 + $0x318] sm:$0xff]
    %v429 = vld [vmem:[#allocation8 + $0x320] sm:$0xff]
    %v430 = vld [vmem:[#allocation8 + $0x328] sm:$0xff]
    %v431 = vld [vmem:[#allocation8 + $0x330] sm:$0xff]
    %v432 = vld [vmem:[#allocation8 + $0x338] sm:$0xff]
    %v433 = vld [vmem:[#allocation8 + $0x340] sm:$0xff]
    %v434 = vld [vmem:[#allocation8 + $0x348] sm:$0xff]
    %v435 = vld [vmem:[#allocation8 + $0x350] sm:$0xff]
    %v436 = vld [vmem:[#allocation8 + $0x358] sm:$0xff]
    %v437 = vld [vmem:[#allocation8 + $0x360] sm:$0xff]
    %v438 = vld [vmem:[#allocation8 + $0x368] sm:$0xff]
    %v439 = vld [vmem:[#allocation8 + $0x370] sm:$0xff]
    %v440 = vld [vmem:[#allocation8 + $0x378] sm:$0xff]
    %v441 = vld [vmem:[#allocation8 + $0x380] sm:$0xff]
    %v442 = vld [vmem:[#allocation8 + $0x388] sm:$0xff]
    %v443 = vld [vmem:[#allocation8 + $0x390] sm:$0xff]
    %v444 = vld [vmem:[#allocation8 + $0x398] sm:$0xff]
    %v445 = vld [vmem:[#allocation8 + $0x3a0] sm:$0xff]
    %v446 = vld [vmem:[#allocation8 + $0x3a8] sm:$0xff]
    %v447 = vld [vmem:[#allocation8 + $0x3b0] sm:$0xff]
    %v448 = vld [vmem:[#allocation8 + $0x3b8] sm:$0xff]
    %v449 = vld [vmem:[#allocation8 + $0x3c0] sm:$0xff]
    %v450 = vld [vmem:[#allocation8 + $0x3c8] sm:$0xff]
    %v451 = vld [vmem:[#allocation8 + $0x3d0] sm:$0xff]
    %v452 = vld [vmem:[#allocation8 + $0x3d8] sm:$0xff]
    %v453 = vld [vmem:[#allocation8 + $0x3e0] sm:$0xff]
    %v454 = vld [vmem:[#allocation8 + $0x3e8] sm:$0xff]
    %v455 = vld [vmem:[#allocation8 + $0x3f0] sm:$0xff]
    %v456 = vld [vmem:[#allocation8 + $0x3f8] sm:$0xff]
    %v457 = vld [vmem:[#allocation8 + $0x400] sm:$0xff]
    %v458 = vld [vmem:[#allocation8 + $0x408] sm:$0xff]
    %v459 = vld [vmem:[#allocation8 + $0x410] sm:$0xff]
    %v460 = vld [vmem:[#allocation8 + $0x418] sm:$0xff]
    %v461 = vld [vmem:[#allocation8 + $0x420] sm:$0xff]
    %v462 = vld [vmem:[#allocation8 + $0x428] sm:$0xff]
    %v463 = vld [vmem:[#allocation8 + $0x430] sm:$0xff]
    %v464 = vld [vmem:[#allocation8 + $0x438] sm:$0xff]
    %v465 = vld [vmem:[#allocation8 + $0x440] sm:$0xff]
    %v466 = vld [vmem:[#allocation8 + $0x448] sm:$0xff]
    %v467 = vld [vmem:[#allocation8 + $0x450] sm:$0xff]
    %v468 = vld [vmem:[#allocation8 + $0x458] sm:$0xff]
    %v469 = vld [vmem:[#allocation8 + $0x460] sm:$0xff]
    %v470 = vld [vmem:[#allocation8 + $0x468] sm:$0xff]
    %v471 = vld [vmem:[#allocation8 + $0x470] sm:$0xff]
    %v472 = vld [vmem:[#allocation8 + $0x478] sm:$0xff]
    %v473 = vld [vmem:[#allocation8 + $0x480] sm:$0xff]
    %v474 = vld [vmem:[#allocation8 + $0x488] sm:$0xff]
    %v475 = vld [vmem:[#allocation8 + $0x490] sm:$0xff]
    %v476 = vld [vmem:[#allocation8 + $0x498] sm:$0xff]
    %v477 = vld [vmem:[#allocation8 + $0x4a0] sm:$0xff]
    %v478 = vld [vmem:[#allocation8 + $0x4a8] sm:$0xff]
    %v479 = vld [vmem:[#allocation8 + $0x4b0] sm:$0xff]
    %v480 = vld [vmem:[#allocation8 + $0x4b8] sm:$0xff]
    %v481 = vld [vmem:[#allocation8 + $0x4c0] sm:$0xff]
    %v482 = vld [vmem:[#allocation8 + $0x4c8] sm:$0xff]
    %v483 = vld [vmem:[#allocation8 + $0x4d0] sm:$0xff]
    %v484 = vld [vmem:[#allocation8 + $0x4d8] sm:$0xff]
    %v485 = vld [vmem:[#allocation8 + $0x4e0] sm:$0xff]
    %v486 = vld [vmem:[#allocation8 + $0x4e8] sm:$0xff]
    %v487 = vld [vmem:[#allocation8 + $0x4f0] sm:$0xff]
    %v488 = vld [vmem:[#allocation8 + $0x4f8] sm:$0xff]
    %v489 = vld [vmem:[#allocation8 + $0x500] sm:$0xff]
    %v490 = vld [vmem:[#allocation8 + $0x508] sm:$0xff]
    %v491 = vld [vmem:[#allocation8 + $0x510] sm:$0xff]
    %v492 = vld [vmem:[#allocation8 + $0x518] sm:$0xff]
    %v493 = vld [vmem:[#allocation8 + $0x520] sm:$0xff]
    %v494 = vld [vmem:[#allocation8 + $0x528] sm:$0xff]
    %v495 = vld [vmem:[#allocation8 + $0x530] sm:$0xff]
    %v496 = vld [vmem:[#allocation8 + $0x538] sm:$0xff]
    %v497 = vld [vmem:[#allocation8 + $0x540] sm:$0xff]
    %v498 = vld [vmem:[#allocation8 + $0x548] sm:$0xff]
    %v499 = vld [vmem:[#allocation8 + $0x550] sm:$0xff]
    %v500 = vld [vmem:[#allocation8 + $0x558] sm:$0xff]
    %v501 = vld [vmem:[#allocation8 + $0x560] sm:$0xff]
    %v502 = vld [vmem:[#allocation8 + $0x568] sm:$0xff]
    %v503 = vld [vmem:[#allocation8 + $0x570] sm:$0xff]
    %v504 = vld [vmem:[#allocation8 + $0x578] sm:$0xff]
    %v505 = vld [vmem:[#allocation8 + $0x580] sm:$0xff]
    %v506 = vld [vmem:[#allocation8 + $0x588] sm:$0xff]
    %v507 = vld [vmem:[#allocation8 + $0x590] sm:$0xff]
    %v508 = vld [vmem:[#allocation8 + $0x598] sm:$0xff]
    %v509 = vld [vmem:[#allocation8 + $0x5a0] sm:$0xff]
    %v510 = vld [vmem:[#allocation8 + $0x5a8] sm:$0xff]
    %v511 = vld [vmem:[#allocation8 + $0x5b0] sm:$0xff]
    %v512 = vld [vmem:[#allocation8 + $0x5b8] sm:$0xff]
    %v513 = vld [vmem:[#allocation8 + $0x5c0] sm:$0xff]
    %v514 = vld [vmem:[#allocation8 + $0x5c8] sm:$0xff]
    %v515 = vld [vmem:[#allocation8 + $0x5d0] sm:$0xff]
    %v516 = vld [vmem:[#allocation8 + $0x5d8] sm:$0xff]
    %v517 = vld [vmem:[#allocation8 + $0x5e0] sm:$0xff]
    %v518 = vld [vmem:[#allocation8 + $0x5e8] sm:$0xff]
    %v519 = vld [vmem:[#allocation8 + $0x5f0] sm:$0xff]
    %v520 = vld [vmem:[#allocation8 + $0x5f8] sm:$0xff]
    %v521 = vld [vmem:[#allocation9] sm:$0x7]
    %v523 = vlaneseq
    %v524 = vshrl.u32 %v523, 7
    %v525 = vsub.s32 0, %v524
    %v526 = vrot.slane %v521, %v525
    %v527 = vlaneseq
    %v528 = vshrl.u32 %v527, 7
    %v529 = vsub.s32 1, %v528
    %v530 = vrot.slane %v521, %v529
    %v531 = vlaneseq
    %v532 = vshrl.u32 %v531, 7
    %v533 = vsub.s32 2, %v532
    %v534 = vrot.slane %v521, %v533
    %538 = vmatprep.subr.mxu0 %v375
    %539 = vmatpush1.msra.mxu0 %v374
    %540 = vmatprep.subr.mxu0 %v372
    %541 = vmatpush1.msra.mxu0 %v371
    %542 = vmatprep.subr.mxu0 %v369
    %543 = vmatpush1.msra.mxu0 %v368
    %544 = vmatprep.subr.mxu0 %v366
    %545 = vmatpush1.msra.mxu0 %v365
    %546 = vmatprep.subr.mxu0 %v363
    %547 = vmatpush1.msra.mxu0 %v362
    %548 = vmatprep.subr.mxu0 %v360
    %549 = vmatpush1.msra.mxu0 %v359
    %550 = vmatprep.subr.mxu0 %v357
    %551 = vmatpush1.msra.mxu0 %v356
    %552 = vmatprep.subr.mxu0 %v354
    %553 = vmatpush1.msra.mxu0 %v353
    %554 = vmatprep.subr.mxu0 %v351
    %555 = vmatpush1.msra.mxu0 %v350
    %556 = vmatprep.subr.mxu0 %v348
    %557 = vmatpush1.msra.mxu0 %v347
    %558 = vmatprep.subr.mxu0 %v345
    %559 = vmatpush1.msra.mxu0 %v344
    %560 = vmatprep.subr.mxu0 %v342
    %561 = vmatpush1.msra.mxu0 %v341
    %562 = vmatprep.subr.mxu0 %v339
    %563 = vmatpush1.msra.mxu0 %v338
    %564 = vmatprep.subr.mxu0 %v336
    %565 = vmatpush1.msra.mxu0 %v335
    %566 = vmatprep.subr.mxu0 %v333
    %567 = vmatpush1.msra.mxu0 %v332
    %568 = vmatprep.subr.mxu0 %v330
    %569 = vmatpush1.msra.mxu0 %v329
    %570 = vmatprep.subr.mxu0 %v423
    %571 = vmatpush2.msra.mxu0 %v422
    %572 = vmatprep.subr.mxu0 %v420
    %573 = vmatpush2.msra.mxu0 %v419
    %574 = vmatprep.subr.mxu0 %v417
    %575 = vmatpush2.msra.mxu0 %v416
    %576 = vmatprep.subr.mxu0 %v414
    %577 = vmatpush2.msra.mxu0 %v413
    %578 = vmatprep.subr.mxu0 %v411
    %579 = vmatpush2.msra.mxu0 %v410
    %580 = vmatprep.subr.mxu0 %v408
    %581 = vmatpush2.msra.mxu0 %v407
    %582 = vmatprep.subr.mxu0 %v405
    %583 = vmatpush2.msra.mxu0 %v404
    %584 = vmatprep.subr.mxu0 %v402
    %585 = vmatpush2.msra.mxu0 %v401
    %586 = vmatprep.subr.mxu0 %v399
    %587 = vmatpush2.msra.mxu0 %v398
    %588 = vmatprep.subr.mxu0 %v396
    %589 = vmatpush2.msra.mxu0 %v395
    %590 = vmatprep.subr.mxu0 %v393
    %591 = vmatpush2.msra.mxu0 %v392
    %592 = vmatprep.subr.mxu0 %v390
    %593 = vmatpush2.msra.mxu0 %v389
    %594 = vmatprep.subr.mxu0 %v387
    %595 = vmatpush2.msra.mxu0 %v386
    %596 = vmatprep.subr.mxu0 %v384
    %597 = vmatpush2.msra.mxu0 %v383
    %598 = vmatprep.subr.mxu0 %v381
    %599 = vmatpush2.msra.mxu0 %v380
    %600 = vmatprep.subr.mxu0 %v378
    %601 = vmatpush2.msra.mxu0 %v377
    %602 = vmatprep.mubr.f32.mxu0 %v326
    %603 = vmatmul.mubr.f32.gmra.mxu0 %v325
    %v604 = vpop.f32.mrf.mxu0
    %v605 = vadd.f32 %v526, %v604
    %v606 = vpop.f32.mrf.mxu0
    %v607 = vadd.f32 %v530, %v606
    %608 = vdwg.mxu0
    %609 = vmatprep.subr.mxu0 %v471
    %610 = vmatpush1.msra.mxu0 %v470
    %611 = vmatprep.subr.mxu0 %v468
    %612 = vmatpush1.msra.mxu0 %v467
    %613 = vmatprep.subr.mxu0 %v465
    %614 = vmatpush1.msra.mxu0 %v464
    %615 = vmatprep.subr.mxu0 %v462
    %616 = vmatpush1.msra.mxu0 %v461
    %617 = vmatprep.subr.mxu0 %v459
    %618 = vmatpush1.msra.mxu0 %v458
    %619 = vmatprep.subr.mxu0 %v456
    %620 = vmatpush1.msra.mxu0 %v455
    %621 = vmatprep.subr.mxu0 %v453
    %622 = vmatpush1.msra.mxu0 %v452
    %623 = vmatprep.subr.mxu0 %v450
    %624 = vmatpush1.msra.mxu0 %v449
    %625 = vmatprep.subr.mxu0 %v447
    %626 = vmatpush1.msra.mxu0 %v446
    %627 = vmatprep.subr.mxu0 %v444
    %628 = vmatpush1.msra.mxu0 %v443
    %629 = vmatprep.subr.mxu0 %v441
    %630 = vmatpush1.msra.mxu0 %v440
    %631 = vmatprep.subr.mxu0 %v438
    %632 = vmatpush1.msra.mxu0 %v437
    %633 = vmatprep.subr.mxu0 %v435
    %634 = vmatpush1.msra.mxu0 %v434
    %635 = vmatprep.subr.mxu0 %v432
    %636 = vmatpush1.msra.mxu0 %v431
    %637 = vmatprep.subr.mxu0 %v429
    %638 = vmatpush1.msra.mxu0 %v428
    %639 = vmatprep.subr.mxu0 %v426
    %640 = vmatpush1.msra.mxu0 %v425
    %641 = vmatprep.subr.mxu0 %v519
    %642 = vmatpush2.msra.mxu0 %v518
    %643 = vmatprep.subr.mxu0 %v516
    %644 = vmatpush2.msra.mxu0 %v515
    %645 = vmatprep.subr.mxu0 %v513
    %646 = vmatpush2.msra.mxu0 %v512
    %647 = vmatprep.subr.mxu0 %v510
    %648 = vmatpush2.msra.mxu0 %v509
    %649 = vmatprep.subr.mxu0 %v507
    %650 = vmatpush2.msra.mxu0 %v506
    %651 = vmatprep.subr.mxu0 %v504
    %652 = vmatpush2.msra.mxu0 %v503
    %653 = vmatprep.subr.mxu0 %v501
    %654 = vmatpush2.msra.mxu0 %v500
    %655 = vmatprep.subr.mxu0 %v498
    %656 = vmatpush2.msra.mxu0 %v497
    %657 = vmatprep.subr.mxu0 %v495
    %658 = vmatpush2.msra.mxu0 %v494
    %659 = vmatprep.subr.mxu0 %v492
    %660 = vmatpush2.msra.mxu0 %v491
    %661 = vmatprep.subr.mxu0 %v489
    %662 = vmatpush2.msra.mxu0 %v488
    %663 = vmatprep.subr.mxu0 %v486
    %664 = vmatpush2.msra.mxu0 %v485
    %665 = vmatprep.subr.mxu0 %v483
    %666 = vmatpush2.msra.mxu0 %v482
    %667 = vmatprep.subr.mxu0 %v480
    %668 = vmatpush2.msra.mxu0 %v479
    %669 = vmatprep.subr.mxu0 %v477
    %670 = vmatpush2.msra.mxu0 %v476
    %671 = vmatprep.subr.mxu0 %v474
    %672 = vmatpush2.msra.mxu0 %v473
    %673 = vmatprep.mubr.f32.mxu0 %v328
    %674 = vmatmul.mubr.f32.gmra.mxu0 %v327
    %v675 = vpop.f32.mrf.mxu0
    %v676 = vadd.f32 %v605, %v675
    %v677 = vpop.f32.mrf.mxu0
    %v678 = vadd.f32 %v607, %v677
    %679 = vdwg.mxu0
    %680 = vmatprep.subr.mxu0 0.0
    %681 = vmatpush1.msra.mxu0 %v376
    %682 = vmatprep.subr.mxu0 0.0
    %683 = vmatpush1.msra.mxu0 %v373
    %684 = vmatprep.subr.mxu0 0.0
    %685 = vmatpush1.msra.mxu0 %v370
    %686 = vmatprep.subr.mxu0 0.0
    %687 = vmatpush1.msra.mxu0 %v367
    %688 = vmatprep.subr.mxu0 0.0
    %689 = vmatpush1.msra.mxu0 %v364
    %690 = vmatprep.subr.mxu0 0.0
    %691 = vmatpush1.msra.mxu0 %v361
    %692 = vmatprep.subr.mxu0 0.0
    %693 = vmatpush1.msra.mxu0 %v358
    %694 = vmatprep.subr.mxu0 0.0
    %695 = vmatpush1.msra.mxu0 %v355
    %696 = vmatprep.subr.mxu0 0.0
    %697 = vmatpush1.msra.mxu0 %v352
    %698 = vmatprep.subr.mxu0 0.0
    %699 = vmatpush1.msra.mxu0 %v349
    %700 = vmatprep.subr.mxu0 0.0
    %701 = vmatpush1.msra.mxu0 %v346
    %702 = vmatprep.subr.mxu0 0.0
    %703 = vmatpush1.msra.mxu0 %v343
    %704 = vmatprep.subr.mxu0 0.0
    %705 = vmatpush1.msra.mxu0 %v340
    %706 = vmatprep.subr.mxu0 0.0
    %707 = vmatpush1.msra.mxu0 %v337
    %708 = vmatprep.subr.mxu0 0.0
    %709 = vmatpush1.msra.mxu0 %v334
    %710 = vmatprep.subr.mxu0 0.0
    %711 = vmatpush1.msra.mxu0 %v331
    %712 = vmatprep.subr.mxu0 0.0
    %713 = vmatpush2.msra.mxu0 %v424
    %714 = vmatprep.subr.mxu0 0.0
    %715 = vmatpush2.msra.mxu0 %v421
    %716 = vmatprep.subr.mxu0 0.0
    %717 = vmatpush2.msra.mxu0 %v418
    %718 = vmatprep.subr.mxu0 0.0
    %719 = vmatpush2.msra.mxu0 %v415
    %720 = vmatprep.subr.mxu0 0.0
    %721 = vmatpush2.msra.mxu0 %v412
    %722 = vmatprep.subr.mxu0 0.0
    %723 = vmatpush2.msra.mxu0 %v409
    %724 = vmatprep.subr.mxu0 0.0
    %725 = vmatpush2.msra.mxu0 %v406
    %726 = vmatprep.subr.mxu0 0.0
    %727 = vmatpush2.msra.mxu0 %v403
    %728 = vmatprep.subr.mxu0 0.0
    %729 = vmatpush2.msra.mxu0 %v400
    %730 = vmatprep.subr.mxu0 0.0
    %731 = vmatpush2.msra.mxu0 %v397
    %732 = vmatprep.subr.mxu0 0.0
    %733 = vmatpush2.msra.mxu0 %v394
    %734 = vmatprep.subr.mxu0 0.0
    %735 = vmatpush2.msra.mxu0 %v391
    %736 = vmatprep.subr.mxu0 0.0
    %737 = vmatpush2.msra.mxu0 %v388
    %738 = vmatprep.subr.mxu0 0.0
    %739 = vmatpush2.msra.mxu0 %v385
    %740 = vmatprep.subr.mxu0 0.0
    %741 = vmatpush2.msra.mxu0 %v382
    %742 = vmatprep.subr.mxu0 0.0
    %743 = vmatpush2.msra.mxu0 %v379
    %744 = vmatprep.mubr.f32.mxu0 %v326
    %745 = vmatmul.mubr.f32.gmra.mxu0 %v325
    %v746 = vpop.f32.mrf.mxu0
    %v747 = vadd.f32 %v534, %v746
    %v748 = vpop.f32.mrf.mxu0
    %749 = vdwg.mxu0
    %750 = vmatprep.subr.mxu0 0.0
    %751 = vmatpush1.msra.mxu0 %v472
    %752 = vmatprep.subr.mxu0 0.0
    %753 = vmatpush1.msra.mxu0 %v469
    %754 = vmatprep.subr.mxu0 0.0
    %755 = vmatpush1.msra.mxu0 %v466
    %756 = vmatprep.subr.mxu0 0.0
    %757 = vmatpush1.msra.mxu0 %v463
    %758 = vmatprep.subr.mxu0 0.0
    %759 = vmatpush1.msra.mxu0 %v460
    %760 = vmatprep.subr.mxu0 0.0
    %761 = vmatpush1.msra.mxu0 %v457
    %762 = vmatprep.subr.mxu0 0.0
    %763 = vmatpush1.msra.mxu0 %v454
    %764 = vmatprep.subr.mxu0 0.0
    %765 = vmatpush1.msra.mxu0 %v451
    %766 = vmatprep.subr.mxu0 0.0
    %767 = vmatpush1.msra.mxu0 %v448
    %768 = vmatprep.subr.mxu0 0.0
    %769 = vmatpush1.msra.mxu0 %v445
    %770 = vmatprep.subr.mxu0 0.0
    %771 = vmatpush1.msra.mxu0 %v442
    %772 = vmatprep.subr.mxu0 0.0
    %773 = vmatpush1.msra.mxu0 %v439
    %774 = vmatprep.subr.mxu0 0.0
    %775 = vmatpush1.msra.mxu0 %v436
    %776 = vmatprep.subr.mxu0 0.0
    %777 = vmatpush1.msra.mxu0 %v433
    %778 = vmatprep.subr.mxu0 0.0
    %779 = vmatpush1.msra.mxu0 %v430
    %780 = vmatprep.subr.mxu0 0.0
    %781 = vmatpush1.msra.mxu0 %v427
    %782 = vmatprep.subr.mxu0 0.0
    %783 = vmatpush2.msra.mxu0 %v520
    %784 = vmatprep.subr.mxu0 0.0
    %785 = vmatpush2.msra.mxu0 %v517
    %786 = vmatprep.subr.mxu0 0.0
    %787 = vmatpush2.msra.mxu0 %v514
    %788 = vmatprep.subr.mxu0 0.0
    %789 = vmatpush2.msra.mxu0 %v511
    %790 = vmatprep.subr.mxu0 0.0
    %791 = vmatpush2.msra.mxu0 %v508
    %792 = vmatprep.subr.mxu0 0.0
    %793 = vmatpush2.msra.mxu0 %v505
    %794 = vmatprep.subr.mxu0 0.0
    %795 = vmatpush2.msra.mxu0 %v502
    %796 = vmatprep.subr.mxu0 0.0
    %797 = vmatpush2.msra.mxu0 %v499
    %798 = vmatprep.subr.mxu0 0.0
    %799 = vmatpush2.msra.mxu0 %v496
    %800 = vmatprep.subr.mxu0 0.0
    %801 = vmatpush2.msra.mxu0 %v493
    %802 = vmatprep.subr.mxu0 0.0
    %803 = vmatpush2.msra.mxu0 %v490
    %804 = vmatprep.subr.mxu0 0.0
    %805 = vmatpush2.msra.mxu0 %v487
    %806 = vmatprep.subr.mxu0 0.0
    %807 = vmatpush2.msra.mxu0 %v484
    %808 = vmatprep.subr.mxu0 0.0
    %809 = vmatpush2.msra.mxu0 %v481
    %810 = vmatprep.subr.mxu0 0.0
    %811 = vmatpush2.msra.mxu0 %v478
    %812 = vmatprep.subr.mxu0 0.0
    %813 = vmatpush2.msra.mxu0 %v475
    %814 = vmatprep.mubr.f32.mxu0 %v328
    %815 = vmatmul.mubr.f32.gmra.mxu0 %v327
    %v816 = vpop.f32.mrf.mxu0
    %v817 = vadd.f32 %v747, %v816
    %v818 = vpop.f32.mrf.mxu0
    %819 = vdwg.mxu0
    %v820 = vmax.f32 %v676, 0.0
    %v821 = vmax.f32 %v678, 0.0
    %v822 = vmax.f32 %v817, 0.0
    %v823 = vld [vmem:[#allocation11] sm:$0x7]
    %v825 = vlaneseq
    %v826 = vshrl.u32 %v825, 7
    %v827 = vsub.s32 0, %v826
    %v828 = vrot.slane %v823, %v827
    %v829 = vlaneseq
    %v830 = vshrl.u32 %v829, 7
    %v831 = vsub.s32 1, %v830
    %v832 = vrot.slane %v823, %v831
    %v833 = vlaneseq
    %v834 = vshrl.u32 %v833, 7
    %v835 = vsub.s32 2, %v834
    %v836 = vrot.slane %v823, %v835
    %v840 = vmul.f32 %v820, %v828
    %v841 = vmul.f32 %v821, %v832
    %v842 = vmul.f32 %v822, %v836
    %v843 = vadd.f32 %v840, %v841
    %v844 = vadd.f32 %v843, %v842
    %845 = vadd.xlane.f32.xlu0 %v844
    %v846 = vpop.xlane.xlu0 %845
    %v847 = vld [vmem:[%s7] sm:$0x1]
    %v848 = vld [vmem:[%s8] sm:$0xff]
    %v849 = vmul.f32 %v846, %v848
    %s850 = sld [smem:[#allocation2]]
    %v851 = vstv %s850
    %vm852 = vcmask 64512
    %v854 = vsel %vm852, %v847, 0
    %856 = vmatprep.subr.mxu0 0.0
    %857 = vmatpush1.msra.mxu0 0.0
    %858 = vmatprep.subr.mxu0 0.0
    %859 = vmatpush1.msra.mxu0 0.0
    %860 = vmatprep.subr.mxu0 0.0
    %861 = vmatpush1.msra.mxu0 0.0
    %862 = vmatprep.subr.mxu0 0.0
    %863 = vmatpush1.msra.mxu0 0.0
    %864 = vmatprep.subr.mxu0 0.0
    %865 = vmatpush1.msra.mxu0 0.0
    %866 = vmatprep.subr.mxu0 0.0
    %867 = vmatpush1.msra.mxu0 0.0
    %868 = vmatprep.subr.mxu0 0.0
    %869 = vmatpush1.msra.mxu0 0.0
    %870 = vmatprep.subr.mxu0 0.0
    %871 = vmatpush1.msra.mxu0 0.0
    %872 = vmatprep.subr.mxu0 0.0
    %873 = vmatpush1.msra.mxu0 0.0
    %874 = vmatprep.subr.mxu0 0.0
    %875 = vmatpush1.msra.mxu0 0.0
    %876 = vmatprep.subr.mxu0 0.0
    %877 = vmatpush1.msra.mxu0 0.0
    %878 = vmatprep.subr.mxu0 0.0
    %879 = vmatpush1.msra.mxu0 0.0
    %880 = vmatprep.subr.mxu0 0.0
    %881 = vmatpush1.msra.mxu0 0.0
    %882 = vmatprep.subr.mxu0 0.0
    %883 = vmatpush1.msra.mxu0 0.0
    %884 = vmatprep.subr.mxu0 0.0
    %885 = vmatpush1.msra.mxu0 0.0
    %886 = vmatprep.subr.mxu0 0.0
    %887 = vmatpush1.msra.mxu0 %v849
    %888 = vmatprep.subr.mxu0 0.0
    %889 = vmatpush2.msra.mxu0 0.0
    %890 = vmatprep.subr.mxu0 0.0
    %891 = vmatpush2.msra.mxu0 0.0
    %892 = vmatprep.subr.mxu0 0.0
    %893 = vmatpush2.msra.mxu0 0.0
    %894 = vmatprep.subr.mxu0 0.0
    %895 = vmatpush2.msra.mxu0 0.0
    %896 = vmatprep.subr.mxu0 0.0
    %897 = vmatpush2.msra.mxu0 0.0
    %898 = vmatprep.subr.mxu0 0.0
    %899 = vmatpush2.msra.mxu0 0.0
    %900 = vmatprep.subr.mxu0 0.0
    %901 = vmatpush2.msra.mxu0 0.0
    %902 = vmatprep.subr.mxu0 0.0
    %903 = vmatpush2.msra.mxu0 0.0
    %904 = vmatprep.subr.mxu0 0.0
    %905 = vmatpush2.msra.mxu0 0.0
    %906 = vmatprep.subr.mxu0 0.0
    %907 = vmatpush2.msra.mxu0 0.0
    %908 = vmatprep.subr.mxu0 0.0
    %909 = vmatpush2.msra.mxu0 0.0
    %910 = vmatprep.subr.mxu0 0.0
    %911 = vmatpush2.msra.mxu0 0.0
    %912 = vmatprep.subr.mxu0 0.0
    %913 = vmatpush2.msra.mxu0 0.0
    %914 = vmatprep.subr.mxu0 0.0
    %915 = vmatpush2.msra.mxu0 0.0
    %916 = vmatprep.subr.mxu0 0.0
    %917 = vmatpush2.msra.mxu0 0.0
    %918 = vmatprep.subr.mxu0 0.0
    %919 = vmatpush2.msra.mxu0 0.0
    %920 = vmatprep.mubr.f32.mxu0 0.0
    %921 = vmatmul.mubr.f32.gmra.mxu0 %v854
    %v922 = vpop.f32.mrf.mxu0
    %v923 = vadd.f32 %v851, %v922
    %v924 = vpop.f32.mrf.mxu0
    %925 = vdwg.mxu0
    %vm926 = vcmask 57344
    %927 = vst.msk [vmem:[#allocation12] sm:$0x1] %vm926, %v923
    // Predicated region
    $region58: #{tpu_custom_call.1} parent=1 // pred_check
      _
    $region59: #{tpu_custom_call.1} parent=1 // pred_check_branch
      %929 = sbr.rel (0) target = $region61
    $region60: #{tpu_custom_call.1} parent=1 // pred_region
      %s931 = ssub.s32 16, 16
      %932 = vsyncadd [#allocation5], %s931
      %s934 = sshll.u32 [#allocation12], 4
      %s935 = int_to_ptr.vmem [resolvable:$true] %s934
      %937 = dma.vmem_to_hbm [thread:$0]  %s935, 16, %s9, [#allocation5]
    $region61: #{tpu_custom_call.1} parent=1 // pred_fallthru
      _
    // Predicated region
    $region62: #{tpu_custom_call.1} parent=1 // pred_check
      _
    $region63: #{tpu_custom_call.1} parent=1 // pred_check_branch
      %939 = sbr.rel (0) target = $region65
    $region64: #{tpu_custom_call.1} parent=1 // pred_region
      %940 = dma.done [#allocation5], 16
    $region65: #{tpu_custom_call.1} parent=1 // pred_fallthru
      _
    %941 = vsyncpa [#allocation4], 1
    %942 = vsyncpa [#allocation7], 1
    %943 = vsyncpa [#allocation10], 1
    %944 = vsyncpa [#allocation5], 1

</llo_original>
